<compile_context>
chip_gen: v5e
topology: v5e:2x2
jax: 0.10.0
libtpu: 0.0.40
codegen_flags: <defaults>
</compile_context>

<pallas_src>
import math
import functools

import jax
import jax.numpy as jnp
from jax.experimental import pallas as pl
from jax.experimental.pallas import tpu as pltpu

_NEG_INF = -1e30


def _round_up(x, m):
    return (x + m - 1) // m * m


def _max_over_subcenters(x, w, k, tile_n):
    """One fused MXU matmul over all k sub-centers, then max over the k lane-aligned slabs."""
    acc = jnp.dot(x, w, preferred_element_type=jnp.float32)          # (TB, k*TN) f32
    cos = acc[:, :tile_n]
    for j in range(1, k):                                            # k tiny -> unrolled at trace
        cos = jnp.maximum(cos, acc[:, j * tile_n:(j + 1) * tile_n])
    return cos                                                       # (TB, TN) f32


def _infer_kernel(x_ref, w_ref, cos_ref, *, k, tile_n):
    cos_ref[...] = _max_over_subcenters(x_ref[...], w_ref[...], k, tile_n)


def _train_kernel(x_ref, w_ref, bias_ref, lab_ref, out_ref, nll_ref,
                  m_scr, l_scr, p_scr, *,
                  k, tile_n, s, cos_m, sin_m, th, mm, masked):
    ci = pl.program_id(1)

    @pl.when(ci == 0)
    def _():
        m_scr[...] = jnp.full_like(m_scr, _NEG_INF)
        l_scr[...] = jnp.zeros_like(l_scr)
        p_scr[...] = jnp.zeros_like(p_scr)

    cosine = _max_over_subcenters(x_ref[...], w_ref[...], k, tile_n)   # (TB, TN) f32

    # boolean one-hot mask via absolute-column iota == label (replaces torch scatter_)
    labels = lab_ref[...]                                              # (TB, 1) int32
    col = ci * tile_n + jax.lax.broadcasted_iota(jnp.int32, cosine.shape, 1)
    is_label = col == labels                                           # (TB, TN) bool

    # ArcFace margin on the per-row picked (label-column) cosine only: all (TB,1) math.
    # Rows whose label is not in this class tile get picked=0, but is_label is all-False for
    # them, so the select below keeps plain cosine everywhere -> identical semantics.
    picked = jnp.sum(jnp.where(is_label, cosine, 0.0), axis=-1, keepdims=True)   # XLU reduce
    sine = jnp.sqrt(jnp.clip(1.0 - picked * picked, 0.0, 1.0))   # keep the clip (bf16 |cos|>1 slop)
    phi = picked * cos_m - sine * sin_m
    phi = jnp.where(picked > th, phi, picked - mm)                     # (TB, 1)

    output = jnp.where(is_label, phi, cosine) * s                      # (TB, TN)
    if masked:
        output = output + bias_ref[...]    # 0 for real classes, -1e30 for padded columns
    out_ref[...] = output

    # online log-softmax / NLL accumulation across class tiles
    m_prev = m_scr[...]
    m_new = jnp.maximum(m_prev, jnp.max(output, axis=-1, keepdims=True))
    l_scr[...] = (l_scr[...] * jnp.exp(m_prev - m_new)
                  + jnp.sum(jnp.exp(output - m_new), axis=-1, keepdims=True))
    p_scr[...] = p_scr[...] + jnp.sum(jnp.where(is_label, output, 0.0),
                                      axis=-1, keepdims=True)
    m_scr[...] = m_new

    @pl.when(ci == pl.num_programs(1) - 1)
    def _():
        # per-row -log_softmax(output)[label]
        nll_ref[...] = -(p_scr[...] - m_scr[...] - jnp.log(l_scr[...]))


def sub_center_arcface_head(x, weight, label=None, *, s=64.0, m=0.5, k=4,
                            tile_b=256, tile_n=512, matmul_dtype=jnp.bfloat16):
    """JAX/Pallas equivalent of SubCenterArcFaceHead.forward."""
    nk, emb = weight.shape
    num_classes = nk // k
    b = x.shape[0]

    # ---- tile sizes: sublane-aligned batch tiles, lane-dense class tiles ----
    tile_b = max(8, min(_round_up(tile_b, 8), _round_up(b, 8)))
    # guarantee >=2 batch tiles whenever the batch allows (v7x dual-TC / megacore uses the
    # "parallel" batch axis; a single batch tile would idle one TensorCore in training)
    if _round_up(b, tile_b) // tile_b < 2 and b > 8:
        tile_b = _round_up((b + 1) // 2, 8)
    tile_n = max(128, min(_round_up(tile_n, 128), _round_up(num_classes, 128)))
    b_pad = _round_up(b, tile_b)
    n_pad = _round_up(num_classes, tile_n)
    n_tiles = n_pad // tile_n
    grid = (b_pad // tile_b, n_tiles)

    # ---- wrapper glue: normalize + re-layout + cast (layout plumbing, not compute hoisting) ----
    # TODO(synk): in a real training setup this normalize / (N*k,E)->(E, n_tiles*k*tile_n)
    # re-layout / bf16 cast should be done once per optimizer step, not every forward.
    x_p = jnp.pad(x.astype(matmul_dtype), ((0, b_pad - b), (0, 0)))
    w32 = weight.astype(jnp.float32).reshape(num_classes, k, emb)        # [n, j] == weight[n*k + j]
    inv = 1.0 / jnp.maximum(jnp.sqrt(jnp.sum(w32 * w32, axis=-1, keepdims=True)), 1e-12)
    wn = jnp.pad(w32 * inv, ((0, n_pad - num_classes), (0, 0), (0, 0)))  # (Npad, k, E) normalized
    # class-tile-major, sub-center-slab layout:
    #   column ci*(k*tile_n) + j*tile_n + t  ==  class (ci*tile_n + t), sub-center j
    w_t = (wn.reshape(n_tiles, tile_n, k, emb)
             .transpose(3, 0, 2, 1)
             .reshape(emb, n_pad * k)
             .astype(matmul_dtype))

    x_spec = pl.BlockSpec((tile_b, emb), lambda bi, ci: (bi, 0))
    w_spec = pl.BlockSpec((emb, k * tile_n), lambda bi, ci: (0, ci))
    out_spec = pl.BlockSpec((tile_b, tile_n), lambda bi, ci: (bi, ci))

    if label is None:
        cos_full = pl.pallas_call(
            functools.partial(_infer_kernel, k=k, tile_n=tile_n),
            out_shape=jax.ShapeDtypeStruct((b_pad, n_pad), jnp.float32),
            grid_spec=pltpu.PrefetchScalarGridSpec(
                num_scalar_prefetch=0,
                grid=grid,
                in_specs=[x_spec, w_spec],
                out_specs=out_spec,
            ),
            compiler_params=pltpu.CompilerParams(
                dimension_semantics=("parallel", "parallel"),
                vmem_limit_bytes=64 * 1024 * 1024),
        )(x_p, w_t)
        return cos_full[:b, :num_classes]

    cos_m_ = math.cos(m)
    sin_m_ = math.sin(m)
    th_ = math.cos(math.pi - m)
    mm_ = math.sin(math.pi - m) * m
    masked = n_pad != num_classes

    lab = jnp.pad(label.astype(jnp.int32), (0, b_pad - b)).reshape(b_pad, 1)
    # additive pad-column mask: 0 for real classes, -1e30 for padded columns (read only if masked)
    bias = jnp.where(jnp.arange(n_pad) < num_classes, 0.0, _NEG_INF).astype(
        jnp.float32).reshape(1, n_pad)

    bias_spec = pl.BlockSpec((1, tile_n), lambda bi, ci: (0, ci))
    lab_spec = pl.BlockSpec((tile_b, 1), lambda bi, ci: (bi, 0))
    nll_spec = pl.BlockSpec((tile_b, 1), lambda bi, ci: (bi, 0))

    kern = functools.partial(_train_kernel, k=k, tile_n=tile_n, s=s,
                             cos_m=cos_m_, sin_m=sin_m_, th=th_, mm=mm_, masked=masked)

    out_full, nll = pl.pallas_call(
        kern,
        out_shape=(jax.ShapeDtypeStruct((b_pad, n_pad), jnp.float32),
                   jax.ShapeDtypeStruct((b_pad, 1), jnp.float32)),
        grid_spec=pltpu.PrefetchScalarGridSpec(
            num_scalar_prefetch=0,
            grid=grid,
            in_specs=[x_spec, w_spec, bias_spec, lab_spec],
            out_specs=[out_spec, nll_spec],
            scratch_shapes=[pltpu.VMEM((tile_b, 1), jnp.float32),   # running max
                            pltpu.VMEM((tile_b, 1), jnp.float32),   # running sum-exp
                            pltpu.VMEM((tile_b, 1), jnp.float32)],  # picked logit
        ),
        compiler_params=pltpu.CompilerParams(
            dimension_semantics=("parallel", "arbitrary"),
            vmem_limit_bytes=64 * 1024 * 1024),
    )(x_p, w_t, bias, lab)

    output = out_full[:b, :num_classes]
    loss = jnp.sum(nll[:b, 0]) / b          # NLLLoss mean over the true batch (pad rows excluded)
    return output, loss


def _reference(x, weight, label, *, s, m, k, matmul_dtype=jnp.bfloat16):
    """Pure-JAX mirror of the torch module (normalize in f32, matmul in matmul_dtype, rest f32)."""
    nk, _ = weight.shape
    n = nk // k
    w32 = weight.astype(jnp.float32)
    inv = 1.0 / jnp.maximum(jnp.sqrt(jnp.sum(w32 * w32, axis=1, keepdims=True)), 1e-12)
    wn = (w32 * inv).astype(matmul_dtype)
    cos_all = jnp.dot(x.astype(matmul_dtype), wn.T, preferred_element_type=jnp.float32)
    cosine = jnp.max(cos_all.reshape(-1, n, k), axis=2)
    if label is None:
        return cosine
    cos_m_, sin_m_ = math.cos(m), math.sin(m)
    th_, mm_ = math.cos(math.pi - m), math.sin(math.pi - m) * m
    sine = jnp.sqrt(jnp.clip(1.0 - cosine * cosine, 0.0, 1.0))
    phi = cosine * cos_m_ - sine * sin_m_
    phi = jnp.where(cosine > th_, phi, cosine - mm_)
    one_hot = jax.nn.one_hot(label, n, dtype=jnp.float32)
    output = (one_hot * phi + (1.0 - one_hot) * cosine) * s
    logp = jax.nn.log_softmax(output, axis=-1)
    loss = -jnp.mean(jnp.sum(one_hot * logp, axis=-1))
    return output, loss


if __name__ == "__main__":
    # Small shapes consistent with the module (embedding_size=128, k=4), chosen so the demo
    # exercises a real 2x2 (batch-tile, class-tile) grid with class padding (200 -> 256).
    B, E, NUM_CLASSES, K = 16, 128, 200, 4
    S, M = 64.0, 0.5

    key = jax.random.PRNGKey(0)
    kx, kw, kl = jax.random.split(key, 3)

    x = jax.random.normal(kx, (B, E), dtype=jnp.float32)
    # deterministic xavier_uniform_: U(-a, a), a = sqrt(6 / (fan_in + fan_out))
    bound = math.sqrt(6.0 / (E + NUM_CLASSES * K))
    weight = jax.random.uniform(kw, (NUM_CLASSES * K, E), dtype=jnp.float32,
                                minval=-bound, maxval=bound)
    label = jax.random.randint(kl, (B,), 0, NUM_CLASSES, dtype=jnp.int32)

    # inference path (label is None): returns cosine logits
    cosine = sub_center_arcface_head(x, weight, None, s=S, m=M, k=K, tile_b=8, tile_n=128)
    # training path: returns (scaled margined logits, NLL loss)
    output, loss = sub_center_arcface_head(x, weight, label, s=S, m=M, k=K, tile_b=8, tile_n=128)
    jax.block_until_ready((cosine, output, loss))

    assert cosine.shape == (B, NUM_CLASSES)
    assert output.shape == (B, NUM_CLASSES)
    assert loss.shape == ()

    # correctness vs a pure-JAX reference using the same normalize->bf16-matmul / f32-math recipe
    cos_ref = _reference(x, weight, None, s=S, m=M, k=K)
    out_ref, loss_ref = _reference(x, weight, label, s=S, m=M, k=K)
    assert bool(jnp.allclose(cosine, cos_ref, rtol=5e-3, atol=5e-3))
    assert bool(jnp.allclose(output, out_ref, rtol=5e-3, atol=5e-2))
    assert bool(jnp.allclose(loss, loss_ref, rtol=5e-3, atol=5e-3))

    print("KERNEL_OK")
</pallas_src>

<mosaic_0001>
module attributes {stable_mosaic.version = 11 : i64} {
  func.func @_infer_kernel(%arg0: i32, %arg1: i32, %arg2: memref<8x128xbf16, #tpu.memory_space<vmem>>, %arg3: memref<128x512xbf16, #tpu.memory_space<vmem>>, %arg4: memref<8x128xf32, #tpu.memory_space<vmem>>) attributes {dimension_semantics = [#tpu.dimension_semantics<parallel>, #tpu.dimension_semantics<parallel>], iteration_bounds = array<i64: 2, 2>, scalar_prefetch = 0 : i64, scratch_operands = 0 : i64, tpu.core_type = #tpu.core_type<tc>, window_params = [{transform_indices = @transform_0, window_bounds = array<i64: 8, 128>}, {transform_indices = @transform_1, window_bounds = array<i64: 128, 512>}, {transform_indices = @transform_2, window_bounds = array<i64: 8, 128>}]} {
    %c0 = arith.constant 0 : index
    %c0_0 = arith.constant 0 : index
    %0 = vector.load %arg2[%c0, %c0_0] : memref<8x128xbf16, #tpu.memory_space<vmem>>, vector<8x128xbf16>
    %c0_1 = arith.constant 0 : index
    %c0_2 = arith.constant 0 : index
    %1 = vector.load %arg3[%c0_1, %c0_2] : memref<128x512xbf16, #tpu.memory_space<vmem>>, vector<128x512xbf16>
    %cst = arith.constant dense<0.000000e+00> : vector<8x512xf32>
    %2 = tpu.matmul %0, %1, %cst {dimension_numbers = #tpu.dot_dimension_numbers<[1], [0], [0], [1], [0, 0, 1, 1], [], []>} : vector<8x128xbf16>, vector<128x512xbf16>, vector<8x512xf32> -> vector<8x512xf32>
    %3 = vector.extract_strided_slice %2 {offsets = [0, 0], sizes = [8, 128], strides = [1, 1]} : vector<8x512xf32> to vector<8x128xf32>
    %4 = vector.extract_strided_slice %2 {offsets = [0, 128], sizes = [8, 128], strides = [1, 1]} : vector<8x512xf32> to vector<8x128xf32>
    %5 = arith.maximumf %3, %4 : vector<8x128xf32>
    %6 = vector.extract_strided_slice %2 {offsets = [0, 256], sizes = [8, 128], strides = [1, 1]} : vector<8x512xf32> to vector<8x128xf32>
    %7 = arith.maximumf %5, %6 : vector<8x128xf32>
    %8 = vector.extract_strided_slice %2 {offsets = [0, 384], sizes = [8, 128], strides = [1, 1]} : vector<8x512xf32> to vector<8x128xf32>
    %9 = arith.maximumf %7, %8 : vector<8x128xf32>
    %c0_3 = arith.constant 0 : index
    %c0_4 = arith.constant 0 : index
    %10 = vector.load %arg4[%c0_3, %c0_4] : memref<8x128xf32, #tpu.memory_space<vmem>>, vector<8x128xf32>
    tpu.vector_store %arg4[%c0_3, %c0_4], %9 {strides = array<i32>} : memref<8x128xf32, #tpu.memory_space<vmem>>, vector<8x128xf32>,
    return
  }
  func.func @transform_0(%arg0: i32, %arg1: i32) -> (i32, i32) {
    %c0_i32 = arith.constant 0 : i32
    %c0_i32_0 = arith.constant 0 : i32
    return %arg0, %c0_i32 : i32, i32
  }
  func.func @transform_1(%arg0: i32, %arg1: i32) -> (i32, i32) {
    %c0_i32 = arith.constant 0 : i32
    %c0_i32_0 = arith.constant 0 : i32
    return %c0_i32, %arg1 : i32, i32
  }
  func.func @transform_2(%arg0: i32, %arg1: i32) -> (i32, i32) {
    %c0_i32 = arith.constant 0 : i32
    return %arg0, %arg1 : i32, i32
  }
}

</mosaic_0001>

<llo_original>
// kernel: tpu_custom_call.1
$region0: #{tpu_custom_call.1}
  #allocation0 [shape = 'u32[]', space=smem, size = 0x4, offset = 0x4, fixed_abs, tag = 'smem constant byte address 0x4 - core index']
  #allocation1 [shape = 'u32[72,128]{1,0:T(1,128)}', space=vmem, size = 0x9000, scoped, tag = 'internal scratch']
  %s0 = inlined_call_operand.hbm [shape: bf16[16,128], index: 0, kind: input, shape index: {}]
  %s1 = inlined_call_operand.hbm [shape: bf16[128,1024], index: 1, kind: input, shape index: {}]
  %s2 = inlined_call_operand.hbm [shape: f32[16,256], index: 2, kind: output, shape index: {}]
  %s3 = sld [smem:[#allocation0]]
  $region49: #{tpu_custom_call.1} parent=0
    _
  %s5 = ssub.s32 1, %s3
  %s6 = scalar_select 0, %s5, %s3
  $region1: #{tpu_custom_call.1} parent=0
    #allocation2 [shape = 'u8[4096]{0}', space=vmem, size = 0x1000, scoped, tag = 'input window, operand 0']
    #allocation3 [shape = 's32[2]{0}', space=sflag, size = 0x8, scoped, tag = 'scoped memory for tpu_custom_call.1']
    #allocation4 [shape = 's32[2]{0}', space=sflag, size = 0x8, scoped, tag = 'scoped memory for tpu_custom_call.1']
    #allocation5 [shape = 'u8[262144]{0}', space=vmem, size = 0x40000, scoped, tag = 'input window, operand 1']
    #allocation6 [shape = 's32[2]{0}', space=sflag, size = 0x8, scoped, tag = 'scoped memory for tpu_custom_call.1']
    #allocation7 [shape = 'u8[8192]{0}', space=vmem, size = 0x2000, scoped, tag = 'output window, operand 0']
    %7 = vsyncpa [#allocation3], 0
    %s8 = scalar_lea.sflag [#allocation3], 1
    %9 = vsyncpa %s8, 0
    %10 = vsyncpa [#allocation6], 0
    %s11 = scalar_lea.sflag [#allocation6], 1
    %12 = vsyncpa %s11, 0
    %13 = vsyncpa [#allocation4], 0
    %s14 = scalar_lea.sflag [#allocation4], 1
    %15 = vsyncpa %s14, 0
    loop: start=0, step=1, limit=6
    $region2: #{tpu_custom_call.1} parent=1 // loop_pre_header
      _
    $region3: #{tpu_custom_call.1} parent=1 // loop_header
      %s17 = sphi 0, %s21
      %p18 = scmp.ge.s32.totalorder %s17, 6
      %s24 = sphi 0, %s36
      %s25 = sphi 0, %s32
      %s26 = sphi 0, %s24
      %s27 = sphi 0, %s25
      %s28 = sphi 0, %s26
      %s29 = sphi 0, %s27
      %s39 = sphi 0, %s41
      %s42 = sphi 0, %s39
      %s43 = sphi 0, %s42
      %s59 = sphi 0, %s43
      %s65 = sphi 0, %s67
      %s68 = sphi 0, %s65
      %s69 = sphi 0, %s68
      %s85 = sphi 0, %s69
      %s93 = sphi 0, %s95
      %s96 = sphi 0, %s93
      %s97 = sphi 0, %s96
      %s113 = sphi 0, %s97
    $region4: #{tpu_custom_call.1} parent=1 // loop_header_branch
      %20 = sbr.rel (%p18) target = $region8
    $region5: #{tpu_custom_call.1} parent=1 // loop_body
      %s22 = ssub.s32 %s17, 1
      %s23 = ssub.s32 %s17, 2
      %s30 = sadd.s32 1, %s25
      %p31 = scmp.ge.s32.totalorder %s30, 2
      %s32 = scalar_select %p31, 0, %s30
      %s33 = sadd.s32 1, %s24
      %s34 = scalar_select %p31, %s33, %s24
      %p35 = scmp.ge.s32.totalorder %s34, 2
      %s36 = scalar_select %p35, 0, %s34
      %s37 = ssub.s32 %s24, %s36
      %p38 = scmp.eq.s32.totalorder %s37, 0
      %s40 = sadd.s32 %s39, 1
      %s41 = scalar_select %p38, %s39, %s40
      %p44 = pneg %p38
      %p45 = scmp.eq.s32.totalorder %s17, 3
      %p46 = por %p44, %p45
      %p47 = scmp.ne.s32.totalorder %s39, %s42
      %p48 = scmp.eq.s32.totalorder %s17, 0
      %p49 = por %p47, %p48
      %p50 = scmp.ne.s32.totalorder %s39, %s42
      %p51 = scmp.eq.s32.totalorder %s22, 3
      %p52 = por %p50, %p51
      %p53 = scmp.ne.s32.totalorder %s42, %s43
      %p54 = scmp.eq.s32.totalorder %s22, 0
      %p55 = por %p53, %p54
      %p56 = scmp.ne.s32.totalorder %s42, %s43
      %p57 = scmp.eq.s32.totalorder %s23, 3
      %p58 = por %p56, %p57
      %p60 = scmp.ne.s32.totalorder %s43, %s59
      %p61 = scmp.eq.s32.totalorder %s23, 0
      %p62 = por %p60, %p61
      %s63 = ssub.s32 %s25, %s32
      %p64 = scmp.eq.s32.totalorder %s63, 0
      %s66 = sadd.s32 %s65, 1
      %s67 = scalar_select %p64, %s65, %s66
      %p70 = pneg %p64
      %p71 = scmp.eq.s32.totalorder %s17, 3
      %p72 = por %p70, %p71
      %p73 = scmp.ne.s32.totalorder %s65, %s68
      %p74 = scmp.eq.s32.totalorder %s17, 0
      %p75 = por %p73, %p74
      %p76 = scmp.ne.s32.totalorder %s65, %s68
      %p77 = scmp.eq.s32.totalorder %s22, 3
      %p78 = por %p76, %p77
      %p79 = scmp.ne.s32.totalorder %s68, %s69
      %p80 = scmp.eq.s32.totalorder %s22, 0
      %p81 = por %p79, %p80
      %p82 = scmp.ne.s32.totalorder %s68, %s69
      %p83 = scmp.eq.s32.totalorder %s23, 3
      %p84 = por %p82, %p83
      %p86 = scmp.ne.s32.totalorder %s69, %s85
      %p87 = scmp.eq.s32.totalorder %s23, 0
      %p88 = por %p86, %p87
      %s89 = ssub.s32 %s24, %s36
      %s90 = ssub.s32 %s25, %s32
      %s91 = sor.u32 %s89, %s90
      %p92 = scmp.eq.s32.totalorder %s91, 0
      %s94 = sadd.s32 %s93, 1
      %s95 = scalar_select %p92, %s93, %s94
      %p98 = pneg %p92
      %p99 = scmp.eq.s32.totalorder %s17, 3
      %p100 = por %p98, %p99
      %p101 = scmp.ne.s32.totalorder %s93, %s96
      %p102 = scmp.eq.s32.totalorder %s17, 0
      %p103 = por %p101, %p102
      %p104 = scmp.ne.s32.totalorder %s93, %s96
      %p105 = scmp.eq.s32.totalorder %s22, 3
      %p106 = por %p104, %p105
      %p107 = scmp.ne.s32.totalorder %s96, %s97
      %p108 = scmp.eq.s32.totalorder %s22, 0
      %p109 = por %p107, %p108
      %p110 = scmp.ne.s32.totalorder %s96, %s97
      %p111 = scmp.eq.s32.totalorder %s23, 3
      %p112 = por %p110, %p111
      %p114 = scmp.ne.s32.totalorder %s97, %s113
      %p115 = scmp.eq.s32.totalorder %s23, 0
      %p116 = por %p114, %p115
      %p117 = scmp.le.s32.totalorder 1, %s17
      %p118 = scmp.lt.s32.totalorder %s17, 5
      %p119 = pnand %p117, %p118
      %p120 = pneg %p119
      // Predicated region
      $region9: #{tpu_custom_call.1} parent=5 // pred_check
        _
      $region10: #{tpu_custom_call.1} parent=5 // pred_check_branch
        %122 = sbr.rel (%p119) target = $region12
      $region11: #{tpu_custom_call.1} parent=5 // pred_region
        %s123 = ssub.s32 %s17, 1
      $region12: #{tpu_custom_call.1} parent=5 // pred_fallthru
        _
      %p124 = scmp.lt.s32.totalorder %s17, 4
      // Predicated region
      $region13: #{tpu_custom_call.1} parent=5 // pred_check
        %p125 = pneg %p124
      $region14: #{tpu_custom_call.1} parent=5 // pred_check_branch
        %127 = sbr.rel (%p125) target = $region16
      $region15: #{tpu_custom_call.1} parent=5 // pred_region
        // Predicated region
        $region17: #{tpu_custom_call.1} parent=15 // pred_check
          %p128 = pneg %p49
        $region18: #{tpu_custom_call.1} parent=15 // pred_check_branch
          %130 = sbr.rel (%p128) target = $region20
        $region19: #{tpu_custom_call.1} parent=15 // pred_region
          %s131 = sand.u32 %s39, 1
          %s132 = scalar_lea.sflag [#allocation3], %s131
          %s133 = sand.u32 %s39, 1
          %s134 = smul.addr %s133, 4
          %s135 = scalar_lea.vmem [#allocation2], %s134
          %137 = vsyncadd %s132, 0
          %s138 = smul.addr %s24, 4
          %s139 = scalar_lea.hbm %s0, %s138
          %s141 = sshll.u32 %s139, 4
          %s142 = int_to_ptr.hbm [resolvable:$true] %s141
          %s143 = sshll.u32 %s135, 4
          %s144 = int_to_ptr.vmem [resolvable:$true] %s143
          %146 = dma.hbm_to_vmem [thread:$0]  %s142, 64, %s144, %s132
        $region20: #{tpu_custom_call.1} parent=15 // pred_fallthru
          _
        // Predicated region
        $region21: #{tpu_custom_call.1} parent=15 // pred_check
          %p147 = pneg %p75
        $region22: #{tpu_custom_call.1} parent=15 // pred_check_branch
          %149 = sbr.rel (%p147) target = $region24
        $region23: #{tpu_custom_call.1} parent=15 // pred_region
          %s150 = sand.u32 %s65, 1
          %s151 = scalar_lea.sflag [#allocation6], %s150
          %s152 = sand.u32 %s65, 1
          %s153 = smul.addr %s152, 256
          %s154 = scalar_lea.vmem [#allocation5], %s153
          %s155 = smul.u32 4, %s25
          %157 = vsyncadd %s151, 0
          %s158 = smul.addr %s155, 4
          %s159 = scalar_lea.hbm %s1, %s158
          %s160 = sshll.u32 %s159, 4
          %s161 = int_to_ptr.hbm [resolvable:$true] %s160
          %s162 = sshll.u32 %s154, 4
          %s163 = int_to_ptr.vmem [resolvable:$true] %s162
          %168 = dma.hbm_to_vmem [thread:$0]  %s161, 4096, %s163, %s151, 512, 256, 16
        $region24: #{tpu_custom_call.1} parent=15 // pred_fallthru
          _
      $region16: #{tpu_custom_call.1} parent=5 // pred_fallthru
        _
      %p169 = scmp.le.s32.totalorder 1, %s17
      %p170 = scmp.lt.s32.totalorder %s17, 5
      %p171 = pnand %p169, %p170
      %p172 = pneg %p171
      // Predicated region
      $region25: #{tpu_custom_call.1} parent=5 // pred_check
        _
      $region26: #{tpu_custom_call.1} parent=5 // pred_check_branch
        %174 = sbr.rel (%p171) target = $region28
      $region27: #{tpu_custom_call.1} parent=5 // pred_region
        %s175 = ssub.s32 %s17, 1
        %s176 = sand.u32 %s42, 1
        %s177 = scalar_lea.sflag [#allocation3], %s176
        %s178 = sand.u32 %s42, 1
        %s179 = smul.addr %s178, 4
        %s180 = scalar_lea.vmem [#allocation2], %s179
        // Predicated region
        $region29: #{tpu_custom_call.1} parent=27 // pred_check
          %p181 = pneg %p55
        $region30: #{tpu_custom_call.1} parent=27 // pred_check_branch
          %183 = sbr.rel (%p181) target = $region32
        $region31: #{tpu_custom_call.1} parent=27 // pred_region
          %185 = dma.done %s177, 64
        $region32: #{tpu_custom_call.1} parent=27 // pred_fallthru
          _
        %s186 = sand.u32 %s68, 1
        %s187 = scalar_lea.sflag [#allocation6], %s186
        %s188 = sand.u32 %s68, 1
        %s189 = smul.addr %s188, 256
        %s190 = scalar_lea.vmem [#allocation5], %s189
        // Predicated region
        $region33: #{tpu_custom_call.1} parent=27 // pred_check
          %p191 = pneg %p81
        $region34: #{tpu_custom_call.1} parent=27 // pred_check_branch
          %193 = sbr.rel (%p191) target = $region36
        $region35: #{tpu_custom_call.1} parent=27 // pred_region
          %195 = dma.done %s187, 4096
        $region36: #{tpu_custom_call.1} parent=27 // pred_fallthru
          _
        %s196 = sand.u32 %s42, 1
        %s197 = scalar_lea.sflag [#allocation3], %s196
        %s198 = sand.u32 %s42, 1
        %s199 = smul.addr %s198, 4
        %s200 = scalar_lea.vmem [#allocation2], %s199
        %p201 = pneg %p55
        %p202 = pneg %p52
        %s203 = sand.u32 %s68, 1
        %s204 = scalar_lea.sflag [#allocation6], %s203
        %s205 = sand.u32 %s68, 1
        %s206 = smul.addr %s205, 256
        %s207 = scalar_lea.vmem [#allocation5], %s206
        %p208 = pneg %p81
        %p209 = pneg %p78
        %p210 = pneg %p109
        %p211 = pneg %p106
        %s212 = sand.u32 %s96, 1
        %s213 = scalar_lea.sflag [#allocation4], %s212
        %s214 = sand.u32 %s96, 1
        %s215 = smul.addr %s214, 8
        %s216 = scalar_lea.vmem [#allocation7], %s215
        %s217 = smul.u32 4, %s27
        %v218 = vld [vmem:[%s180] sm:$0xf]
        %v219 = vld [vmem:[%s190] sm:$0xff]
        %v220 = vld [vmem:[%s190 + $0x8] sm:$0xff]
        %v221 = vld [vmem:[%s190 + $0x10] sm:$0xff]
        %v222 = vld [vmem:[%s190 + $0x18] sm:$0xff]
        %v223 = vld [vmem:[%s190 + $0x20] sm:$0xff]
        %v224 = vld [vmem:[%s190 + $0x28] sm:$0xff]
        %v225 = vld [vmem:[%s190 + $0x30] sm:$0xff]
        %v226 = vld [vmem:[%s190 + $0x38] sm:$0xff]
        %v227 = vld [vmem:[%s190 + $0x40] sm:$0xff]
        %v228 = vld [vmem:[%s190 + $0x48] sm:$0xff]
        %v229 = vld [vmem:[%s190 + $0x50] sm:$0xff]
        %v230 = vld [vmem:[%s190 + $0x58] sm:$0xff]
        %v231 = vld [vmem:[%s190 + $0x60] sm:$0xff]
        %v232 = vld [vmem:[%s190 + $0x68] sm:$0xff]
        %v233 = vld [vmem:[%s190 + $0x70] sm:$0xff]
        %v234 = vld [vmem:[%s190 + $0x78] sm:$0xff]
        %v235 = vld [vmem:[%s190 + $0x80] sm:$0xff]
        %v236 = vld [vmem:[%s190 + $0x88] sm:$0xff]
        %v237 = vld [vmem:[%s190 + $0x90] sm:$0xff]
        %v238 = vld [vmem:[%s190 + $0x98] sm:$0xff]
        %v239 = vld [vmem:[%s190 + $0xa0] sm:$0xff]
        %v240 = vld [vmem:[%s190 + $0xa8] sm:$0xff]
        %v241 = vld [vmem:[%s190 + $0xb0] sm:$0xff]
        %v242 = vld [vmem:[%s190 + $0xb8] sm:$0xff]
        %v243 = vld [vmem:[%s190 + $0xc0] sm:$0xff]
        %v244 = vld [vmem:[%s190 + $0xc8] sm:$0xff]
        %v245 = vld [vmem:[%s190 + $0xd0] sm:$0xff]
        %v246 = vld [vmem:[%s190 + $0xd8] sm:$0xff]
        %v247 = vld [vmem:[%s190 + $0xe0] sm:$0xff]
        %v248 = vld [vmem:[%s190 + $0xe8] sm:$0xff]
        %v249 = vld [vmem:[%s190 + $0xf0] sm:$0xff]
        %v250 = vld [vmem:[%s190 + $0xf8] sm:$0xff]
        %v283 = vunpack.c.l.b16 %v219
        %v284 = vunpack.c.h.b16 %v219
        %v285 = vunpack.c.l.b16 %v220
        %v286 = vunpack.c.h.b16 %v220
        %v287 = vunpack.c.l.b16 %v221
        %v288 = vunpack.c.h.b16 %v221
        %v289 = vunpack.c.l.b16 %v222
        %v290 = vunpack.c.h.b16 %v222
        %v291 = vunpack.c.l.b16 %v223
        %v292 = vunpack.c.h.b16 %v223
        %v293 = vunpack.c.l.b16 %v224
        %v294 = vunpack.c.h.b16 %v224
        %v295 = vunpack.c.l.b16 %v225
        %v296 = vunpack.c.h.b16 %v225
        %v297 = vunpack.c.l.b16 %v226
        %v298 = vunpack.c.h.b16 %v226
        %v299 = vunpack.c.l.b16 %v227
        %v300 = vunpack.c.h.b16 %v227
        %v301 = vunpack.c.l.b16 %v228
        %v302 = vunpack.c.h.b16 %v228
        %v303 = vunpack.c.l.b16 %v229
        %v304 = vunpack.c.h.b16 %v229
        %v305 = vunpack.c.l.b16 %v230
        %v306 = vunpack.c.h.b16 %v230
        %v307 = vunpack.c.l.b16 %v231
        %v308 = vunpack.c.h.b16 %v231
        %v309 = vunpack.c.l.b16 %v232
        %v310 = vunpack.c.h.b16 %v232
        %v311 = vunpack.c.l.b16 %v233
        %v312 = vunpack.c.h.b16 %v233
        %v313 = vunpack.c.l.b16 %v234
        %v314 = vunpack.c.h.b16 %v234
        %v315 = vunpack.c.l.b16 %v235
        %v316 = vunpack.c.h.b16 %v235
        %v317 = vunpack.c.l.b16 %v236
        %v318 = vunpack.c.h.b16 %v236
        %v319 = vunpack.c.l.b16 %v237
        %v320 = vunpack.c.h.b16 %v237
        %v321 = vunpack.c.l.b16 %v238
        %v322 = vunpack.c.h.b16 %v238
        %v323 = vunpack.c.l.b16 %v239
        %v324 = vunpack.c.h.b16 %v239
        %v325 = vunpack.c.l.b16 %v240
        %v326 = vunpack.c.h.b16 %v240
        %v327 = vunpack.c.l.b16 %v241
        %v328 = vunpack.c.h.b16 %v241
        %v329 = vunpack.c.l.b16 %v242
        %v330 = vunpack.c.h.b16 %v242
        %v331 = vunpack.c.l.b16 %v243
        %v332 = vunpack.c.h.b16 %v243
        %v333 = vunpack.c.l.b16 %v244
        %v334 = vunpack.c.h.b16 %v244
        %v335 = vunpack.c.l.b16 %v245
        %v336 = vunpack.c.h.b16 %v245
        %v337 = vunpack.c.l.b16 %v246
        %v338 = vunpack.c.h.b16 %v246
        %v339 = vunpack.c.l.b16 %v247
        %v340 = vunpack.c.h.b16 %v247
        %v341 = vunpack.c.l.b16 %v248
        %v342 = vunpack.c.h.b16 %v248
        %v343 = vunpack.c.l.b16 %v249
        %v344 = vunpack.c.h.b16 %v249
        %v345 = vunpack.c.l.b16 %v250
        %v346 = vunpack.c.h.b16 %v250
        %v347 = vpack.c.b16 %v287, %v283
        %v348 = vpack.c.b16 %v288, %v284
        %v349 = vpack.c.b16 %v289, %v285
        %v350 = vpack.c.b16 %v290, %v286
        %v351 = vpack.c.b16 %v295, %v291
        %v352 = vpack.c.b16 %v296, %v292
        %v353 = vpack.c.b16 %v297, %v293
        %v354 = vpack.c.b16 %v298, %v294
        %v355 = vpack.c.b16 %v303, %v299
        %v356 = vpack.c.b16 %v304, %v300
        %v357 = vpack.c.b16 %v305, %v301
        %v358 = vpack.c.b16 %v306, %v302
        %v359 = vpack.c.b16 %v311, %v307
        %v360 = vpack.c.b16 %v312, %v308
        %v361 = vpack.c.b16 %v313, %v309
        %v362 = vpack.c.b16 %v314, %v310
        %v363 = vpack.c.b16 %v319, %v315
        %v364 = vpack.c.b16 %v320, %v316
        %v365 = vpack.c.b16 %v321, %v317
        %v366 = vpack.c.b16 %v322, %v318
        %v367 = vpack.c.b16 %v327, %v323
        %v368 = vpack.c.b16 %v328, %v324
        %v369 = vpack.c.b16 %v329, %v325
        %v370 = vpack.c.b16 %v330, %v326
        %v371 = vpack.c.b16 %v335, %v331
        %v372 = vpack.c.b16 %v336, %v332
        %v373 = vpack.c.b16 %v337, %v333
        %v374 = vpack.c.b16 %v338, %v334
        %v375 = vpack.c.b16 %v343, %v339
        %v376 = vpack.c.b16 %v344, %v340
        %v377 = vpack.c.b16 %v345, %v341
        %v378 = vpack.c.b16 %v346, %v342
        %411 = vmatpush.bf16.msra.mxu0 %v375
        %412 = vmatpush.bf16.msra.mxu0 %v371
        %413 = vmatpush.bf16.msra.mxu0 %v367
        %414 = vmatpush.bf16.msra.mxu0 %v363
        %415 = vmatpush.bf16.msra.mxu0 %v359
        %416 = vmatpush.bf16.msra.mxu0 %v355
        %417 = vmatpush.bf16.msra.mxu0 %v351
        %418 = vmatpush.bf16.msra.mxu0 %v347
        %419 = vmatmul.bf16.gmra.mxu0 %v218
        %v420 = vpop.f32.mrf.mxu0
        %v421 = vadd.f32 0.0, %v420
        %v422 = vpop.f32.mrf.mxu0
        %423 = vdwg.mxu0
        %424 = vmatpush.bf16.msra.mxu0 %v376
        %425 = vmatpush.bf16.msra.mxu0 %v372
        %426 = vmatpush.bf16.msra.mxu0 %v368
        %427 = vmatpush.bf16.msra.mxu0 %v364
        %428 = vmatpush.bf16.msra.mxu0 %v360
        %429 = vmatpush.bf16.msra.mxu0 %v356
        %430 = vmatpush.bf16.msra.mxu0 %v352
        %431 = vmatpush.bf16.msra.mxu0 %v348
        %432 = vmatmul.bf16.gmra.mxu0 %v218
        %v433 = vpop.f32.mrf.mxu0
        %v434 = vadd.f32 0.0, %v433
        %v435 = vpop.f32.mrf.mxu0
        %436 = vdwg.mxu0
        %437 = vmatpush.bf16.msra.mxu0 %v377
        %438 = vmatpush.bf16.msra.mxu0 %v373
        %439 = vmatpush.bf16.msra.mxu0 %v369
        %440 = vmatpush.bf16.msra.mxu0 %v365
        %441 = vmatpush.bf16.msra.mxu0 %v361
        %442 = vmatpush.bf16.msra.mxu0 %v357
        %443 = vmatpush.bf16.msra.mxu0 %v353
        %444 = vmatpush.bf16.msra.mxu0 %v349
        %445 = vmatmul.bf16.gmra.mxu0 %v218
        %v446 = vpop.f32.mrf.mxu0
        %v447 = vadd.f32 0.0, %v446
        %v448 = vpop.f32.mrf.mxu0
        %449 = vdwg.mxu0
        %450 = vmatpush.bf16.msra.mxu0 %v378
        %451 = vmatpush.bf16.msra.mxu0 %v374
        %452 = vmatpush.bf16.msra.mxu0 %v370
        %453 = vmatpush.bf16.msra.mxu0 %v366
        %454 = vmatpush.bf16.msra.mxu0 %v362
        %455 = vmatpush.bf16.msra.mxu0 %v358
        %456 = vmatpush.bf16.msra.mxu0 %v354
        %457 = vmatpush.bf16.msra.mxu0 %v350
        %458 = vmatmul.bf16.gmra.mxu0 %v218
        %v459 = vpop.f32.mrf.mxu0
        %v460 = vadd.f32 0.0, %v459
        %v461 = vpop.f32.mrf.mxu0
        %462 = vdwg.mxu0
        %v463 = vmax.f32 %v421, %v434
        %v464 = vmax.f32 %v463, %v447
        %v465 = vmax.f32 %v464, %v460
        %466 = vst [vmem:[%s216] sm:$0xff] %v465
        %s467 = sand.u32 %s96, 1
        %s468 = scalar_lea.sflag [#allocation4], %s467
        %s469 = sand.u32 %s96, 1
        %s470 = smul.addr %s469, 8
        %s471 = scalar_lea.vmem [#allocation7], %s470
        // Predicated region
        $region37: #{tpu_custom_call.1} parent=27 // pred_check
          %p472 = pneg %p106
        $region38: #{tpu_custom_call.1} parent=27 // pred_check_branch
          %474 = sbr.rel (%p472) target = $region40
        $region39: #{tpu_custom_call.1} parent=27 // pred_region
          %476 = vsyncadd %s468, 0
          %s477 = smul.addr %s26, 2
          %s478 = sadd.s32 %s27, %s477
          %s479 = smul.addr %s478, 8
          %s480 = scalar_lea.hbm %s2, %s479
          %s482 = sshll.u32 %s471, 4
          %s483 = int_to_ptr.vmem [resolvable:$true] %s482
          %s484 = sshll.u32 %s480, 4
          %s485 = int_to_ptr.hbm [resolvable:$true] %s484
          %487 = dma.vmem_to_hbm [thread:$0]  %s483, 128, %s485, %s468
        $region40: #{tpu_custom_call.1} parent=27 // pred_fallthru
          _
      $region28: #{tpu_custom_call.1} parent=5 // pred_fallthru
        _
      %p488 = scmp.le.s32.totalorder 2, %s17
      // Predicated region
      $region41: #{tpu_custom_call.1} parent=5 // pred_check
        %p489 = pneg %p488
      $region42: #{tpu_custom_call.1} parent=5 // pred_check_branch
        %491 = sbr.rel (%p489) target = $region44
      $region43: #{tpu_custom_call.1} parent=5 // pred_region
        %s492 = ssub.s32 %s17, 2
        // Predicated region
        $region45: #{tpu_custom_call.1} parent=43 // pred_check
          %p493 = pneg %p112
        $region46: #{tpu_custom_call.1} parent=43 // pred_check_branch
          %495 = sbr.rel (%p493) target = $region48
        $region47: #{tpu_custom_call.1} parent=43 // pred_region
          %s496 = sand.u32 %s97, 1
          %s497 = scalar_lea.sflag [#allocation4], %s496
          %s498 = sand.u32 %s97, 1
          %s499 = smul.addr %s498, 8
          %s500 = scalar_lea.vmem [#allocation7], %s499
          %502 = dma.done %s497, 128
        $region48: #{tpu_custom_call.1} parent=43 // pred_fallthru
          _
      $region44: #{tpu_custom_call.1} parent=5 // pred_fallthru
        _
    $region6: #{tpu_custom_call.1} parent=1 // loop_footer
      %s21 = sadd.s32 1, %s17
    $region7: #{tpu_custom_call.1} parent=1 // loop_footer_branch
      %16 = sbr.rel target = $region3
    $region8: #{tpu_custom_call.1} parent=1 // loop_exit
      _
    %503 = vsyncpa [#allocation3], 1
    %s504 = scalar_lea.sflag [#allocation3], 1
    %505 = vsyncpa %s504, 1
    %506 = vsyncpa [#allocation6], 1
    %s507 = scalar_lea.sflag [#allocation6], 1
    %508 = vsyncpa %s507, 1
    %509 = vsyncpa [#allocation4], 1
    %s510 = scalar_lea.sflag [#allocation4], 1
    %511 = vsyncpa %s510, 1

</llo_original>
